<compile_context>
chip_gen: v7x
topology: tpu7x:2x2x1
jax: 0.10.0
libtpu: 0.0.40
codegen_flags: <defaults>
</compile_context>

<pallas_src>
import functools

import jax
import jax.numpy as jnp
from jax.experimental import pallas as pl
from jax.experimental.pallas import tpu as pltpu


# --------------------------------------------------------------------------- #
# Kernels
# --------------------------------------------------------------------------- #

def _sdpa_kernel(q_ref, k_ref, v_ref, bias_ref, ctx_ref, prob_ref=None, *,
                 scale, approx_recip):
    # Block shapes per grid step (b, h, q):
    #   q_ref   : (1, HB, TQ, D)
    #   k_ref   : (1, HB, S,  D)
    #   v_ref   : (1, HB, S,  D)
    #   bias_ref: (1, 1, S)   f32 additive key-padding bias (0 or -1e9)
    #   ctx_ref : (1, HB, TQ, D)
    #   prob_ref: (1, HB, TQ, S)   (optional)
    q = q_ref[0]
    if scale != 1.0:                       # f32 path: fold scale into Q (O(TQ*D))
        q = q * jnp.asarray(scale, q.dtype)
    k = k_ref[0]
    v = v_ref[0]

    # Batched QK^T as a dot_general contraction over D; f32 accumulation on the MXU.
    scores = jnp.einsum("hqd,hkd->hqk", q, k, preferred_element_type=jnp.float32)

    # masked_fill_(attn_mask, -1e9) as a single broadcast add of the f32 bias.
    scores = scores + bias_ref[...]

    # Numerically stable softmax over keys (torch Softmax(dim=-1)).
    row_max = jnp.max(scores, axis=-1, keepdims=True)
    exps = jnp.exp(scores - row_max)
    denom = jnp.sum(exps, axis=-1, keepdims=True)
    if approx_recip:
        probs = exps * pl.reciprocal(denom, approx=True)   # EUP vrcp, VPU stays free
    else:
        probs = exps / denom                                # exact for f32 prob output

    # dropout: eval-mode identity (see TODO at top of file)

    # context = P @ V, f32 accumulate; P cast to V's dtype for the MXU fast path.
    ctx = jnp.einsum("hqk,hkd->hqd", probs.astype(v.dtype), v,
                     preferred_element_type=jnp.float32)

    ctx_ref[0] = ctx.astype(ctx_ref.dtype)
    if prob_ref is not None:
        prob_ref[0] = probs.astype(prob_ref.dtype)


def _sdpa_flash_kernel(q_ref, k_ref, v_ref, bias_ref, ctx_ref,
                       m_sc, l_sc, acc_sc, *, scale):
    # Flash-style online softmax over a KV-tiled grid axis (return_prob=False path).
    # Block shapes per grid step (b, h, q, kv):
    #   q_ref : (1, HB, TQ, D)    k_ref/v_ref : (1, HB, TK, D)
    #   bias_ref : (1, 1, TK)     ctx_ref : (1, HB, TQ, D)
    #   scratch: m_sc/l_sc (HB, TQ, 1) f32, acc_sc (HB, TQ, D) f32
    kv = pl.program_id(3)

    @pl.when(kv == 0)
    def _():
        m_sc[...] = jnp.full_like(m_sc, -jnp.inf)
        l_sc[...] = jnp.zeros_like(l_sc)
        acc_sc[...] = jnp.zeros_like(acc_sc)

    q = q_ref[0]
    if scale != 1.0:
        q = q * jnp.asarray(scale, q.dtype)

    s = jnp.einsum("hqd,hkd->hqk", q, k_ref[0],
                   preferred_element_type=jnp.float32)
    s = s + bias_ref[...]

    m_new = jnp.maximum(m_sc[...], jnp.max(s, axis=-1, keepdims=True))
    alpha = jnp.exp(m_sc[...] - m_new)
    p = jnp.exp(s - m_new)
    l_sc[...] = alpha * l_sc[...] + jnp.sum(p, axis=-1, keepdims=True)
    acc_sc[...] = alpha * acc_sc[...] + jnp.einsum(
        "hqk,hkd->hqd", p.astype(v_ref.dtype), v_ref[0],
        preferred_element_type=jnp.float32)
    m_sc[...] = m_new

    @pl.when(kv == pl.num_programs(3) - 1)
    def _():
        ctx_ref[0] = (acc_sc[...] * pl.reciprocal(l_sc[...], approx=True)
                      ).astype(ctx_ref.dtype)


# --------------------------------------------------------------------------- #
# Tiling / VMEM-budget helpers
# --------------------------------------------------------------------------- #

def _device_vmem_plan():
    """Returns (tiling budget bytes, vmem_limit_bytes) for the current chip."""
    kind = ""
    try:
        kind = jax.devices()[0].device_kind.lower()
    except Exception:
        pass
    if "v5" in kind or "v6" in kind:       # 128 MiB physical VMEM
        return 88 << 20, 100 << 20
    # v7x has only 64 MiB physical VMEM; unknown chips: stay conservative.
    return 40 << 20, 48 << 20


def _largest_divisor_tile(dim, requested, multiple):
    """Largest divisor of `dim` that is a multiple of `multiple` and <= requested,
    or `dim` itself (a full-extent block is always legal)."""
    if requested is None or requested >= dim:
        return dim
    t = max(multiple, (requested // multiple) * multiple)
    for cand in range(t, multiple - 1, -multiple):
        if dim % cand == 0:
            return cand
    return dim


def _divisors_desc(n):
    return [d for d in range(n, 0, -1) if n % d == 0]


def _vmem_bytes_full(h_block, q_block, S, D, in_isz, out_isz, prob_isz, return_prob):
    dbl = 2                                               # double-buffered pipeline
    kv = 2 * h_block * S * D * in_isz * dbl               # K + V blocks
    q = h_block * q_block * D * in_isz * dbl
    ctx = h_block * q_block * D * out_isz * dbl
    prob = h_block * q_block * S * prob_isz * dbl if return_prob else 0
    scratch = 3 * h_block * q_block * S * 4               # f32 scores/exps intermediates
    return kv + q + ctx + prob + scratch


def _vmem_bytes_flash(h_block, q_block, kv_block, D, in_isz, out_isz):
    dbl = 2
    kv = 2 * h_block * kv_block * D * in_isz * dbl
    q = h_block * q_block * D * in_isz * dbl
    ctx = h_block * q_block * D * out_isz * dbl
    acc = h_block * q_block * (D + 2) * 4                 # m, l, acc accumulators
    scratch = 3 * h_block * q_block * kv_block * 4        # f32 s/p intermediates
    return kv + q + ctx + acc + scratch


def _fit_blocks_full(H, S, D, q_block, in_isz, out_isz, prob_isz, return_prob, budget):
    for hb in _divisors_desc(H):
        if _vmem_bytes_full(hb, q_block, S, D, in_isz, out_isz,
                            prob_isz, return_prob) <= budget:
            return hb, q_block
    qb = q_block
    while qb > 8:                                         # shrink the query tile too
        qb = _largest_divisor_tile(S, qb // 2, 8)
        if _vmem_bytes_full(1, qb, S, D, in_isz, out_isz,
                            prob_isz, return_prob) <= budget:
            return 1, qb
        if qb == S:
            break
    return 1, qb


def _fit_h_flash(H, q_block, kv_block, D, in_isz, out_isz, budget):
    for hb in _divisors_desc(H):
        if _vmem_bytes_flash(hb, q_block, kv_block, D, in_isz, out_isz) <= budget:
            return hb
    return 1


# --------------------------------------------------------------------------- #
# Wrapper
# --------------------------------------------------------------------------- #

def scaled_dot_product_attention(
    Q, K, V, attn_mask, *,
    d_head=None,
    return_prob=True,
    prob_dtype=jnp.bfloat16,     # bf16 halves the dominant S^2 prob writeback
    matmul_dtype=jnp.bfloat16,   # bf16 MXU fast path, f32 accumulation; None = f32
    h_block=None,                # heads per grid step (auto-derived from VMEM budget)
    q_block=None,                # query tile (auto: 512 big-VMEM chips, 256 otherwise)
    kv_block=None,               # enable flash KV tiling (only used if return_prob=False)
    vmem_limit_bytes=None,
):
    """Q, K, V: [B, H, S, D]; attn_mask: [B, S] or [B, 1, 1, S] key-padding mask."""
    B, H, S, D = Q.shape
    if d_head is None:
        d_head = D
    scale = 1.0 / float(d_head) ** 0.5
    out_dtype = Q.dtype

    budget, default_limit = _device_vmem_plan()
    if vmem_limit_bytes is None:
        vmem_limit_bytes = default_limit
    else:
        budget = min(budget, int(0.85 * vmem_limit_bytes))

    # Fold 1/sqrt(d_head) into Q in f32 *before* the low-precision cast (the scale is
    # never quantized; fuses with the cast, no extra HBM pass).  On the f32 path the
    # kernel applies the scale itself (O(TQ*D) per step).
    kernel_scale = scale
    if matmul_dtype is not None and jnp.dtype(matmul_dtype) != jnp.dtype(Q.dtype):
        Q = (Q.astype(jnp.float32) * scale).astype(matmul_dtype)
        K = K.astype(matmul_dtype)
        V = V.astype(matmul_dtype)
        kernel_scale = 1.0

    # Shrink ALBERT's broadcastable mask to an additive f32 key-padding bias (B,1,S).
    if attn_mask.ndim == 4:
        assert attn_mask.shape[1] == 1 and attn_mask.shape[2] == 1, (
            "expected a broadcastable key-padding mask [B,1,1,S]")
        attn_mask = attn_mask[:, 0, 0, :]
    assert attn_mask.shape == (B, S), f"mask shape {attn_mask.shape} != {(B, S)}"
    bias = jnp.where(attn_mask.astype(bool),
                     jnp.float32(-1e9), jnp.float32(0.0)).reshape(B, 1, S)

    in_isz = jnp.dtype(Q.dtype).itemsize
    out_isz = jnp.dtype(out_dtype).itemsize
    prob_isz = jnp.dtype(prob_dtype).itemsize

    if q_block is None:
        q_block = 512 if budget >= (80 << 20) else 256
    q_block = _largest_divisor_tile(S, q_block, 8)

    use_flash = (kv_block is not None) and (not return_prob)
    if not use_flash:
        auto_h, auto_q = _fit_blocks_full(H, S, D, q_block, in_isz, out_isz,
                                          prob_isz, return_prob, budget)
        over = _vmem_bytes_full(auto_h, auto_q, S, D, in_isz, out_isz,
                                prob_isz, return_prob) > budget
        if over and not return_prob:
            # Full-S scores don't fit even at h_block=1: go flash-style.
            use_flash = True
            if kv_block is None:
                kv_block = 1024
        else:
            if h_block is None:
                h_block = auto_h
                q_block = auto_q

    if use_flash:
        kv_block = _largest_divisor_tile(S, kv_block, 128)
        if h_block is None:
            h_block = _fit_h_flash(H, q_block, kv_block, D, in_isz, out_isz, budget)

    if h_block is None:
        h_block = H
    assert H % h_block == 0, "h_block must divide H"

    compiler_params = pltpu.CompilerParams(
        # Query (and KV) tile axes stay off megacore sharding: K/V blocks are resident
        # across them, so sharding them across v7x's two cores doubles K/V reads.
        dimension_semantics=(("parallel", "parallel", "arbitrary", "arbitrary")
                             if use_flash else
                             ("parallel", "parallel", "arbitrary")),
        vmem_limit_bytes=vmem_limit_bytes,
    )

    if use_flash:
        grid = (B, H // h_block, S // q_block, S // kv_block)
        q_spec = pl.BlockSpec((1, h_block, q_block, D),
                              lambda b, h, q, kv: (b, h, q, 0))
        kv_spec = pl.BlockSpec((1, h_block, kv_block, D),
                               lambda b, h, q, kv: (b, h, kv, 0))
        bias_spec = pl.BlockSpec((1, 1, kv_block), lambda b, h, q, kv: (b, 0, kv))
        ctx_spec = pl.BlockSpec((1, h_block, q_block, D),
                                lambda b, h, q, kv: (b, h, q, 0))

        kernel = functools.partial(_sdpa_flash_kernel, scale=kernel_scale)
        ctx = pl.pallas_call(
            kernel,
            out_shape=jax.ShapeDtypeStruct((B, H, S, D), out_dtype),
            grid_spec=pltpu.PrefetchScalarGridSpec(
                num_scalar_prefetch=0,
                grid=grid,
                in_specs=[q_spec, kv_spec, kv_spec, bias_spec],
                out_specs=ctx_spec,
                scratch_shapes=[
                    pltpu.VMEM((h_block, q_block, 1), jnp.float32),
                    pltpu.VMEM((h_block, q_block, 1), jnp.float32),
                    pltpu.VMEM((h_block, q_block, D), jnp.float32),
                ],
            ),
            compiler_params=compiler_params,
        )(Q, K, V, bias)
        return ctx

    grid = (B, H // h_block, S // q_block)
    q_spec = pl.BlockSpec((1, h_block, q_block, D), lambda b, h, q: (b, h, q, 0))
    kv_spec = pl.BlockSpec((1, h_block, S, D), lambda b, h, q: (b, h, 0, 0))
    bias_spec = pl.BlockSpec((1, 1, S), lambda b, h, q: (b, 0, 0))
    ctx_spec = pl.BlockSpec((1, h_block, q_block, D), lambda b, h, q: (b, h, q, 0))
    prob_spec = pl.BlockSpec((1, h_block, q_block, S), lambda b, h, q: (b, h, q, 0))

    if return_prob:
        out_shape = (jax.ShapeDtypeStruct((B, H, S, D), out_dtype),
                     jax.ShapeDtypeStruct((B, H, S, S), prob_dtype))
        out_specs = (ctx_spec, prob_spec)
    else:
        out_shape = jax.ShapeDtypeStruct((B, H, S, D), out_dtype)
        out_specs = ctx_spec

    approx_recip = (not return_prob) or (jnp.dtype(prob_dtype) != jnp.dtype(jnp.float32))
    kernel = functools.partial(_sdpa_kernel, scale=kernel_scale,
                               approx_recip=approx_recip)

    outs = pl.pallas_call(
        kernel,
        out_shape=out_shape,
        grid_spec=pltpu.PrefetchScalarGridSpec(
            num_scalar_prefetch=0,
            grid=grid,
            in_specs=[q_spec, kv_spec, kv_spec, bias_spec],
            out_specs=out_specs,
        ),
        compiler_params=compiler_params,
    )(Q, K, V, bias)

    if return_prob:
        ctx, prob = outs
        return ctx, prob
    return outs


# --------------------------------------------------------------------------- #
# Reference + test
# --------------------------------------------------------------------------- #

def _reference(Q, K, V, key_padding_mask, scale):
    scores = jnp.einsum("bhqd,bhkd->bhqk", Q, K) * scale
    scores = jnp.where(key_padding_mask[:, None, None, :], -1e9, scores)
    probs = jax.nn.softmax(scores, axis=-1)
    ctx = jnp.einsum("bhqk,bhkd->bhqd", probs, V)
    return ctx, probs


if __name__ == "__main__":
    # Small, module-consistent shapes: batch=2, heads=2, seq=8, d_head=32
    B, H, S, D = 2, 2, 8, 32
    key = jax.random.PRNGKey(0)
    kq, kk, kvv, km = jax.random.split(key, 4)

    Q = jax.random.normal(kq, (B, H, S, D), dtype=jnp.float32)
    K = jax.random.normal(kk, (B, H, S, D), dtype=jnp.float32)
    V = jax.random.normal(kvv, (B, H, S, D), dtype=jnp.float32)
    pad_mask = jax.random.bernoulli(km, p=0.25, shape=(B, S))   # True == masked key

    scale = 1.0 / D ** 0.5
    ref_ctx, ref_prob = _reference(Q, K, V, pad_mask, scale)

    # 1) exact-dtype path (f32 matmuls, f32 probs) — matches the torch forward.
    ctx, prob = scaled_dot_product_attention(
        Q, K, V, pad_mask, d_head=D, matmul_dtype=None, prob_dtype=jnp.float32)
    jax.block_until_ready((ctx, prob))
    assert jnp.allclose(ctx, ref_ctx, atol=1e-2, rtol=1e-2)
    assert jnp.allclose(prob, ref_prob, atol=1e-2, rtol=1e-2)

    # 2) default fast path: bf16 MXU matmuls (f32 accumulate) + bf16 prob writeback.
    ctx_b, prob_b = scaled_dot_product_attention(Q, K, V, pad_mask, d_head=D)
    jax.block_until_ready((ctx_b, prob_b))
    assert jnp.allclose(ctx_b.astype(jnp.float32), ref_ctx, atol=5e-2, rtol=5e-2)
    assert jnp.allclose(prob_b.astype(jnp.float32), ref_prob, atol=5e-2, rtol=5e-2)

    # 3) flash-style KV-tiled path (return_prob=False), longer sequence, f32 matmuls.
    S2 = 256
    kq2, kk2, kv2, km2 = jax.random.split(jax.random.PRNGKey(0), 4)
    Q2 = jax.random.normal(kq2, (B, H, S2, D), dtype=jnp.float32)
    K2 = jax.random.normal(kk2, (B, H, S2, D), dtype=jnp.float32)
    V2 = jax.random.normal(kv2, (B, H, S2, D), dtype=jnp.float32)
    mask2 = jax.random.bernoulli(km2, p=0.25, shape=(B, S2))
    ref_ctx2, _ = _reference(Q2, K2, V2, mask2, scale)
    ctx2 = scaled_dot_product_attention(
        Q2, K2, V2, mask2, d_head=D, return_prob=False,
        matmul_dtype=None, kv_block=128)
    jax.block_until_ready(ctx2)
    assert jnp.allclose(ctx2, ref_ctx2, atol=1e-2, rtol=1e-2)

    print("KERNEL_OK")
</pallas_src>

<mosaic_0001>
module attributes {stable_mosaic.version = 11 : i64} {
  func.func @_sdpa_kernel(%arg0: i32, %arg1: i32, %arg2: i32, %arg3: memref<1x2x8x32xf32, #tpu.memory_space<vmem>>, %arg4: memref<1x2x8x32xf32, #tpu.memory_space<vmem>>, %arg5: memref<1x2x8x32xf32, #tpu.memory_space<vmem>>, %arg6: memref<1x1x8xf32, #tpu.memory_space<vmem>>, %arg7: memref<1x2x8x32xf32, #tpu.memory_space<vmem>>, %arg8: memref<1x2x8x8xf32, #tpu.memory_space<vmem>>) attributes {dimension_semantics = [#tpu.dimension_semantics<parallel>, #tpu.dimension_semantics<parallel>, #tpu.dimension_semantics<arbitrary>], iteration_bounds = array<i64: 2, 1, 1>, scalar_prefetch = 0 : i64, scratch_operands = 0 : i64, tpu.core_type = #tpu.core_type<tc>, window_params = [{transform_indices = @transform_0, window_bounds = array<i64: 1, 2, 8, 32>}, {transform_indices = @transform_1, window_bounds = array<i64: 1, 2, 8, 32>}, {transform_indices = @transform_2, window_bounds = array<i64: 1, 2, 8, 32>}, {transform_indices = @transform_3, window_bounds = array<i64: 1, 1, 8>}, {transform_indices = @transform_4, window_bounds = array<i64: 1, 2, 8, 32>}, {transform_indices = @transform_5, window_bounds = array<i64: 1, 2, 8, 8>}]} {
    %c0 = arith.constant 0 : index
    %c0_0 = arith.constant 0 : index
    %c0_1 = arith.constant 0 : index
    %c0_2 = arith.constant 0 : index
    %0 = vector.load %arg3[%c0, %c0_0, %c0_1, %c0_2] : memref<1x2x8x32xf32, #tpu.memory_space<vmem>>, vector<1x2x8x32xf32>
    %1 = vector.shape_cast %0 : vector<1x2x8x32xf32> to vector<2x8x32xf32>
    %cst = arith.constant 0.176776692 : f32
    %2 = vector.broadcast %cst : f32 to vector<2x8x32xf32>
    %3 = arith.mulf %1, %2 : vector<2x8x32xf32>
    %c0_3 = arith.constant 0 : index
    %c0_4 = arith.constant 0 : index
    %c0_5 = arith.constant 0 : index
    %c0_6 = arith.constant 0 : index
    %4 = vector.load %arg4[%c0_3, %c0_4, %c0_5, %c0_6] : memref<1x2x8x32xf32, #tpu.memory_space<vmem>>, vector<1x2x8x32xf32>
    %5 = vector.shape_cast %4 : vector<1x2x8x32xf32> to vector<2x8x32xf32>
    %c0_7 = arith.constant 0 : index
    %c0_8 = arith.constant 0 : index
    %c0_9 = arith.constant 0 : index
    %c0_10 = arith.constant 0 : index
    %6 = vector.load %arg5[%c0_7, %c0_8, %c0_9, %c0_10] : memref<1x2x8x32xf32, #tpu.memory_space<vmem>>, vector<1x2x8x32xf32>
    %7 = vector.shape_cast %6 : vector<1x2x8x32xf32> to vector<2x8x32xf32>
    "tpu.trace_start"() <{level = 10 : i32, message = "hqd,hkd->hqk"}> : () -> ()
    %cst_11 = arith.constant dense<0.000000e+00> : vector<2x8x8xf32>
    %8 = tpu.matmul %3, %5, %cst_11 {dimension_numbers = #tpu.dot_dimension_numbers<[2], [2], [1], [1], [0, 0, 0, 1, 1, 1], [0], [0]>} : vector<2x8x32xf32>, vector<2x8x32xf32>, vector<2x8x8xf32> -> vector<2x8x8xf32>
    "tpu.trace_stop"() : () -> ()
    %c0_12 = arith.constant 0 : index
    %c0_13 = arith.constant 0 : index
    %c0_14 = arith.constant 0 : index
    %9 = vector.load %arg6[%c0_12, %c0_13, %c0_14] : memref<1x1x8xf32, #tpu.memory_space<vmem>>, vector<1x1x8xf32>
    %10 = vector.broadcast %9 : vector<1x1x8xf32> to vector<2x8x8xf32>
    %11 = arith.addf %8, %10 : vector<2x8x8xf32>
    %cst_15 = arith.constant dense<0xFF800000> : vector<2x8xf32>
    %12 = vector.multi_reduction <maximumf>, %11, %cst_15 [2] : vector<2x8x8xf32> to vector<2x8xf32>
    %13 = vector.shape_cast %12 : vector<2x8xf32> to vector<2x8x1xf32>
    %14 = vector.broadcast %13 : vector<2x8x1xf32> to vector<2x8x8xf32>
    %15 = arith.subf %11, %14 : vector<2x8x8xf32>
    %16 = math.exp %15 : vector<2x8x8xf32>
    %cst_16 = arith.constant dense<0.000000e+00> : vector<2x8xf32>
    %17 = vector.multi_reduction <add>, %16, %cst_16 [2] : vector<2x8x8xf32> to vector<2x8xf32>
    %18 = vector.shape_cast %17 : vector<2x8xf32> to vector<2x8x1xf32>
    %19 = vector.broadcast %18 : vector<2x8x1xf32> to vector<2x8x8xf32>
    %20 = arith.divf %16, %19 : vector<2x8x8xf32>
    "tpu.trace_start"() <{level = 10 : i32, message = "hqk,hkd->hqd"}> : () -> ()
    %cst_17 = arith.constant dense<0.000000e+00> : vector<2x8x32xf32>
    %21 = tpu.matmul %20, %7, %cst_17 {dimension_numbers = #tpu.dot_dimension_numbers<[2], [1], [1], [2], [0, 0, 0, 1, 1, 2], [0], [0]>} : vector<2x8x8xf32>, vector<2x8x32xf32>, vector<2x8x32xf32> -> vector<2x8x32xf32>
    "tpu.trace_stop"() : () -> ()
    %c0_18 = arith.constant 0 : index
    %c0_19 = arith.constant 0 : index
    %c0_20 = arith.constant 0 : index
    %c0_21 = arith.constant 0 : index
    %22 = vector.load %arg7[%c0_18, %c0_19, %c0_20, %c0_21] : memref<1x2x8x32xf32, #tpu.memory_space<vmem>>, vector<1x2x8x32xf32>
    %23 = vector.shape_cast %22 : vector<1x2x8x32xf32> to vector<2x8x32xf32>
    %24 = vector.shape_cast %21 : vector<2x8x32xf32> to vector<1x2x8x32xf32>
    tpu.vector_store %arg7[%c0_18, %c0_19, %c0_20, %c0_21], %24 {strides = array<i32>} : memref<1x2x8x32xf32, #tpu.memory_space<vmem>>, vector<1x2x8x32xf32>,
    %c0_22 = arith.constant 0 : index
    %c0_23 = arith.constant 0 : index
    %c0_24 = arith.constant 0 : index
    %c0_25 = arith.constant 0 : index
    %25 = vector.load %arg8[%c0_22, %c0_23, %c0_24, %c0_25] : memref<1x2x8x8xf32, #tpu.memory_space<vmem>>, vector<1x2x8x8xf32>
    %26 = vector.shape_cast %25 : vector<1x2x8x8xf32> to vector<2x8x8xf32>
    %27 = vector.shape_cast %20 : vector<2x8x8xf32> to vector<1x2x8x8xf32>
    tpu.vector_store %arg8[%c0_22, %c0_23, %c0_24, %c0_25], %27 {strides = array<i32>} : memref<1x2x8x8xf32, #tpu.memory_space<vmem>>, vector<1x2x8x8xf32>,
    return
  }
  func.func @transform_0(%arg0: i32, %arg1: i32, %arg2: i32) -> (i32, i32, i32, i32) {
    %c0_i32 = arith.constant 0 : i32
    %c0_i32_0 = arith.constant 0 : i32
    return %arg0, %arg1, %arg2, %c0_i32 : i32, i32, i32, i32
  }
  func.func @transform_1(%arg0: i32, %arg1: i32, %arg2: i32) -> (i32, i32, i32, i32) {
    %c0_i32 = arith.constant 0 : i32
    %c0_i32_0 = arith.constant 0 : i32
    %c0_i32_1 = arith.constant 0 : i32
    return %arg0, %arg1, %c0_i32, %c0_i32_0 : i32, i32, i32, i32
  }
  func.func @transform_2(%arg0: i32, %arg1: i32, %arg2: i32) -> (i32, i32, i32, i32) {
    %c0_i32 = arith.constant 0 : i32
    %c0_i32_0 = arith.constant 0 : i32
    %c0_i32_1 = arith.constant 0 : i32
    return %arg0, %arg1, %c0_i32, %c0_i32_0 : i32, i32, i32, i32
  }
  func.func @transform_3(%arg0: i32, %arg1: i32, %arg2: i32) -> (i32, i32, i32) {
    %c0_i32 = arith.constant 0 : i32
    %c0_i32_0 = arith.constant 0 : i32
    %c0_i32_1 = arith.constant 0 : i32
    return %arg0, %c0_i32, %c0_i32_0 : i32, i32, i32
  }
  func.func @transform_4(%arg0: i32, %arg1: i32, %arg2: i32) -> (i32, i32, i32, i32) {
    %c0_i32 = arith.constant 0 : i32
    %c0_i32_0 = arith.constant 0 : i32
    return %arg0, %arg1, %arg2, %c0_i32 : i32, i32, i32, i32
  }
  func.func @transform_5(%arg0: i32, %arg1: i32, %arg2: i32) -> (i32, i32, i32, i32) {
    %c0_i32 = arith.constant 0 : i32
    %c0_i32_0 = arith.constant 0 : i32
    return %arg0, %arg1, %arg2, %c0_i32 : i32, i32, i32, i32
  }
}

</mosaic_0001>

<llo_original>
// kernel: tpu_custom_call.1
$region0: #{tpu_custom_call.1}
  #allocation0 [shape = 'u32[]', space=smem, size = 0x4, offset = 0x4, fixed_abs, tag = 'smem constant byte address 0x4 - core index']
  #allocation1 [shape = 'u32[144,128]{1,0:T(1,128)}', space=vmem, size = 0x12000, scoped, tag = 'internal scratch']
  %s0 = inlined_call_operand.hbm [shape: f32[2,2,8,32], index: 0, kind: input, shape index: {}]
  %s1 = inlined_call_operand.hbm [shape: f32[2,2,8,32], index: 1, kind: input, shape index: {}]
  %s2 = inlined_call_operand.hbm [shape: f32[2,2,8,32], index: 2, kind: input, shape index: {}]
  %s3 = inlined_call_operand.vmem [shape: f32[2,1,8], index: 3, kind: input, shape index: {}]
  %s4 = inlined_call_operand.hbm [shape: f32[2,2,8,32], index: 4, kind: output, shape index: {0}]
  %s5 = inlined_call_operand.hbm [shape: f32[2,2,8,8], index: 5, kind: output, shape index: {1}]
  %6 = xla_tuple %s4, %s5
  %s7 = sld [smem:[#allocation0]]
  $region69: #{tpu_custom_call.1} parent=0
    _
  %s9 = ssub.s32 1, %s7
  %s10 = scalar_select 0, %s9, %s7
  $region1: #{tpu_custom_call.1} parent=0
    #allocation2 [shape = 'u8[16384]{0}', space=vmem, size = 0x4000, scoped, tag = 'input window, operand 0']
    #allocation3 [shape = 's32[2]{0}', space=sflag, size = 0x8, scoped, tag = 'scoped memory for tpu_custom_call.1']
    #allocation4 [shape = 's32[2]{0}', space=sflag, size = 0x8, scoped, tag = 'scoped memory for tpu_custom_call.1']
    #allocation5 [shape = 'u8[16384]{0}', space=vmem, size = 0x4000, scoped, tag = 'input window, operand 1']
    #allocation6 [shape = 's32[2]{0}', space=sflag, size = 0x8, scoped, tag = 'scoped memory for tpu_custom_call.1']
    #allocation7 [shape = 'u8[16384]{0}', space=vmem, size = 0x4000, scoped, tag = 'input window, operand 2']
    #allocation8 [shape = 'u8[16384]{0}', space=vmem, size = 0x4000, scoped, tag = 'output window, operand 0']
    #allocation9 [shape = 'u8[16384]{0}', space=vmem, size = 0x4000, scoped, tag = 'output window, operand 1']
    #allocation10 [shape = 's32[2]{0}', space=sflag, size = 0x8, scoped, tag = 'scoped memory for tpu_custom_call.1']
    %11 = vsyncpa [#allocation3], 0
    %s12 = scalar_lea.sflag [#allocation3], 1
    %13 = vsyncpa %s12, 0
    %14 = vsyncpa [#allocation6], 0
    %s15 = scalar_lea.sflag [#allocation6], 1
    %16 = vsyncpa %s15, 0
    %17 = vsyncpa [#allocation4], 0
    %s18 = scalar_lea.sflag [#allocation4], 1
    %19 = vsyncpa %s18, 0
    %20 = vsyncpa [#allocation10], 0
    %s21 = scalar_lea.sflag [#allocation10], 1
    %22 = vsyncpa %s21, 0
    loop: start=0, step=1, limit=4
    $region2: #{tpu_custom_call.1} parent=1 // loop_pre_header
      _
    $region3: #{tpu_custom_call.1} parent=1 // loop_header
      %s24 = sphi 0, %s28
      %p25 = scmp.ge.s32.totalorder %s24, 4
      %s31 = sphi 0, %s50
      %s32 = sphi 0, %s46
      %s33 = sphi 0, %s42
      %s34 = sphi 0, %s31
      %s35 = sphi 0, %s32
      %s36 = sphi 0, %s33
      %s37 = sphi 0, %s34
      %s38 = sphi 0, %s35
      %s39 = sphi 0, %s36
      %s57 = sphi 0, %s59
      %s60 = sphi 0, %s57
      %s61 = sphi 0, %s60
      %s77 = sphi 0, %s61
      %s85 = sphi 0, %s87
      %s88 = sphi 0, %s85
      %s89 = sphi 0, %s88
      %s105 = sphi 0, %s89
      %s113 = sphi 0, %s115
      %s116 = sphi 0, %s113
      %s117 = sphi 0, %s116
      %s133 = sphi 0, %s117
      %s139 = sphi 0, %s141
      %s142 = sphi 0, %s139
      %s143 = sphi 0, %s142
      %s159 = sphi 0, %s143
      %s169 = sphi 0, %s171
      %s172 = sphi 0, %s169
      %s173 = sphi 0, %s172
      %s189 = sphi 0, %s173
      %s199 = sphi 0, %s201
      %s202 = sphi 0, %s199
      %s203 = sphi 0, %s202
      %s219 = sphi 0, %s203
    $region4: #{tpu_custom_call.1} parent=1 // loop_header_branch
      %27 = sbr.rel (%p25) target = $region8
    $region5: #{tpu_custom_call.1} parent=1 // loop_body
      %s29 = ssub.s32 %s24, 1
      %s30 = ssub.s32 %s24, 2
      %s40 = sadd.s32 1, %s33
      %p41 = scmp.ge.s32.totalorder %s40, 1
      %s42 = scalar_select %p41, 0, %s40
      %s43 = sadd.s32 1, %s32
      %s44 = scalar_select %p41, %s43, %s32
      %p45 = scmp.ge.s32.totalorder %s44, 1
      %s46 = scalar_select %p45, 0, %s44
      %s47 = sadd.s32 1, %s31
      %s48 = scalar_select %p45, %s47, %s31
      %p49 = scmp.ge.s32.totalorder %s48, 2
      %s50 = scalar_select %p49, 0, %s48
      %s51 = ssub.s32 %s31, %s50
      %s52 = ssub.s32 %s32, %s46
      %s53 = sor.u32 %s51, %s52
      %s54 = ssub.s32 %s33, %s42
      %s55 = sor.u32 %s53, %s54
      %p56 = scmp.eq.s32.totalorder %s55, 0
      %s58 = sadd.s32 %s57, 1
      %s59 = scalar_select %p56, %s57, %s58
      %p62 = pneg %p56
      %p63 = scmp.eq.s32.totalorder %s24, 1
      %p64 = por %p62, %p63
      %p65 = scmp.ne.s32.totalorder %s57, %s60
      %p66 = scmp.eq.s32.totalorder %s24, 0
      %p67 = por %p65, %p66
      %p68 = scmp.ne.s32.totalorder %s57, %s60
      %p69 = scmp.eq.s32.totalorder %s29, 1
      %p70 = por %p68, %p69
      %p71 = scmp.ne.s32.totalorder %s60, %s61
      %p72 = scmp.eq.s32.totalorder %s29, 0
      %p73 = por %p71, %p72
      %p74 = scmp.ne.s32.totalorder %s60, %s61
      %p75 = scmp.eq.s32.totalorder %s30, 1
      %p76 = por %p74, %p75
      %p78 = scmp.ne.s32.totalorder %s61, %s77
      %p79 = scmp.eq.s32.totalorder %s30, 0
      %p80 = por %p78, %p79
      %s81 = ssub.s32 %s31, %s50
      %s82 = ssub.s32 %s32, %s46
      %s83 = sor.u32 %s81, %s82
      %p84 = scmp.eq.s32.totalorder %s83, 0
      %s86 = sadd.s32 %s85, 1
      %s87 = scalar_select %p84, %s85, %s86
      %p90 = pneg %p84
      %p91 = scmp.eq.s32.totalorder %s24, 1
      %p92 = por %p90, %p91
      %p93 = scmp.ne.s32.totalorder %s85, %s88
      %p94 = scmp.eq.s32.totalorder %s24, 0
      %p95 = por %p93, %p94
      %p96 = scmp.ne.s32.totalorder %s85, %s88
      %p97 = scmp.eq.s32.totalorder %s29, 1
      %p98 = por %p96, %p97
      %p99 = scmp.ne.s32.totalorder %s88, %s89
      %p100 = scmp.eq.s32.totalorder %s29, 0
      %p101 = por %p99, %p100
      %p102 = scmp.ne.s32.totalorder %s88, %s89
      %p103 = scmp.eq.s32.totalorder %s30, 1
      %p104 = por %p102, %p103
      %p106 = scmp.ne.s32.totalorder %s89, %s105
      %p107 = scmp.eq.s32.totalorder %s30, 0
      %p108 = por %p106, %p107
      %s109 = ssub.s32 %s31, %s50
      %s110 = ssub.s32 %s32, %s46
      %s111 = sor.u32 %s109, %s110
      %p112 = scmp.eq.s32.totalorder %s111, 0
      %s114 = sadd.s32 %s113, 1
      %s115 = scalar_select %p112, %s113, %s114
      %p118 = pneg %p112
      %p119 = scmp.eq.s32.totalorder %s24, 1
      %p120 = por %p118, %p119
      %p121 = scmp.ne.s32.totalorder %s113, %s116
      %p122 = scmp.eq.s32.totalorder %s24, 0
      %p123 = por %p121, %p122
      %p124 = scmp.ne.s32.totalorder %s113, %s116
      %p125 = scmp.eq.s32.totalorder %s29, 1
      %p126 = por %p124, %p125
      %p127 = scmp.ne.s32.totalorder %s116, %s117
      %p128 = scmp.eq.s32.totalorder %s29, 0
      %p129 = por %p127, %p128
      %p130 = scmp.ne.s32.totalorder %s116, %s117
      %p131 = scmp.eq.s32.totalorder %s30, 1
      %p132 = por %p130, %p131
      %p134 = scmp.ne.s32.totalorder %s117, %s133
      %p135 = scmp.eq.s32.totalorder %s30, 0
      %p136 = por %p134, %p135
      %s137 = ssub.s32 %s31, %s50
      %p138 = scmp.eq.s32.totalorder %s137, 0
      %s140 = sadd.s32 %s139, 1
      %s141 = scalar_select %p138, %s139, %s140
      %p144 = pneg %p138
      %p145 = scmp.eq.s32.totalorder %s24, 1
      %p146 = por %p144, %p145
      %p147 = scmp.ne.s32.totalorder %s139, %s142
      %p148 = scmp.eq.s32.totalorder %s24, 0
      %p149 = por %p147, %p148
      %p150 = scmp.ne.s32.totalorder %s139, %s142
      %p151 = scmp.eq.s32.totalorder %s29, 1
      %p152 = por %p150, %p151
      %p153 = scmp.ne.s32.totalorder %s142, %s143
      %p154 = scmp.eq.s32.totalorder %s29, 0
      %p155 = por %p153, %p154
      %p156 = scmp.ne.s32.totalorder %s142, %s143
      %p157 = scmp.eq.s32.totalorder %s30, 1
      %p158 = por %p156, %p157
      %p160 = scmp.ne.s32.totalorder %s143, %s159
      %p161 = scmp.eq.s32.totalorder %s30, 0
      %p162 = por %p160, %p161
      %s163 = ssub.s32 %s31, %s50
      %s164 = ssub.s32 %s32, %s46
      %s165 = sor.u32 %s163, %s164
      %s166 = ssub.s32 %s33, %s42
      %s167 = sor.u32 %s165, %s166
      %p168 = scmp.eq.s32.totalorder %s167, 0
      %s170 = sadd.s32 %s169, 1
      %s171 = scalar_select %p168, %s169, %s170
      %p174 = pneg %p168
      %p175 = scmp.eq.s32.totalorder %s24, 1
      %p176 = por %p174, %p175
      %p177 = scmp.ne.s32.totalorder %s169, %s172
      %p178 = scmp.eq.s32.totalorder %s24, 0
      %p179 = por %p177, %p178
      %p180 = scmp.ne.s32.totalorder %s169, %s172
      %p181 = scmp.eq.s32.totalorder %s29, 1
      %p182 = por %p180, %p181
      %p183 = scmp.ne.s32.totalorder %s172, %s173
      %p184 = scmp.eq.s32.totalorder %s29, 0
      %p185 = por %p183, %p184
      %p186 = scmp.ne.s32.totalorder %s172, %s173
      %p187 = scmp.eq.s32.totalorder %s30, 1
      %p188 = por %p186, %p187
      %p190 = scmp.ne.s32.totalorder %s173, %s189
      %p191 = scmp.eq.s32.totalorder %s30, 0
      %p192 = por %p190, %p191
      %s193 = ssub.s32 %s31, %s50
      %s194 = ssub.s32 %s32, %s46
      %s195 = sor.u32 %s193, %s194
      %s196 = ssub.s32 %s33, %s42
      %s197 = sor.u32 %s195, %s196
      %p198 = scmp.eq.s32.totalorder %s197, 0
      %s200 = sadd.s32 %s199, 1
      %s201 = scalar_select %p198, %s199, %s200
      %p204 = pneg %p198
      %p205 = scmp.eq.s32.totalorder %s24, 1
      %p206 = por %p204, %p205
      %p207 = scmp.ne.s32.totalorder %s199, %s202
      %p208 = scmp.eq.s32.totalorder %s24, 0
      %p209 = por %p207, %p208
      %p210 = scmp.ne.s32.totalorder %s199, %s202
      %p211 = scmp.eq.s32.totalorder %s29, 1
      %p212 = por %p210, %p211
      %p213 = scmp.ne.s32.totalorder %s202, %s203
      %p214 = scmp.eq.s32.totalorder %s29, 0
      %p215 = por %p213, %p214
      %p216 = scmp.ne.s32.totalorder %s202, %s203
      %p217 = scmp.eq.s32.totalorder %s30, 1
      %p218 = por %p216, %p217
      %p220 = scmp.ne.s32.totalorder %s203, %s219
      %p221 = scmp.eq.s32.totalorder %s30, 0
      %p222 = por %p220, %p221
      %p223 = scmp.le.s32.totalorder 1, %s24
      %p224 = scmp.lt.s32.totalorder %s24, 3
      %p225 = pnand %p223, %p224
      %p226 = pneg %p225
      // Predicated region
      $region9: #{tpu_custom_call.1} parent=5 // pred_check
        _
      $region10: #{tpu_custom_call.1} parent=5 // pred_check_branch
        %228 = sbr.rel (%p225) target = $region12
      $region11: #{tpu_custom_call.1} parent=5 // pred_region
        %s229 = ssub.s32 %s24, 1
      $region12: #{tpu_custom_call.1} parent=5 // pred_fallthru
        _
      %p230 = scmp.lt.s32.totalorder %s24, 2
      // Predicated region
      $region13: #{tpu_custom_call.1} parent=5 // pred_check
        %p231 = pneg %p230
      $region14: #{tpu_custom_call.1} parent=5 // pred_check_branch
        %233 = sbr.rel (%p231) target = $region16
      $region15: #{tpu_custom_call.1} parent=5 // pred_region
        // Predicated region
        $region17: #{tpu_custom_call.1} parent=15 // pred_check
          %p234 = pneg %p67
        $region18: #{tpu_custom_call.1} parent=15 // pred_check_branch
          %236 = sbr.rel (%p234) target = $region20
        $region19: #{tpu_custom_call.1} parent=15 // pred_region
          %s237 = sand.u32 %s57, 1
          %s238 = scalar_lea.sflag [#allocation3], %s237
          %s239 = sand.u32 %s57, 1
          %s240 = smul.addr %s239, 16
          %s241 = scalar_lea.vmem [#allocation2], %s240
          %s242 = smul.u32 2, %s32
          %s244 = ssub.s32 256, 256
          %245 = vsyncadd %s238, %s244
          %s246 = sadd.s32 %s33, %s242
          %s247 = smul.addr %s31, 2
          %s248 = sadd.s32 %s246, %s247
          %s249 = smul.addr %s248, 128
          %s250 = scalar_lea.hbm %s0, %s249
          %s251 = sshll.u32 %s241, 4
          %s252 = int_to_ptr.vmem [resolvable:$true] %s251
          %257 = dma.hbm_to_vmem [thread:$0]  %s250, 256, %s252, %s238, 128, 128, 8
        $region20: #{tpu_custom_call.1} parent=15 // pred_fallthru
          _
        // Predicated region
        $region21: #{tpu_custom_call.1} parent=15 // pred_check
          %p258 = pneg %p95
        $region22: #{tpu_custom_call.1} parent=15 // pred_check_branch
          %260 = sbr.rel (%p258) target = $region24
        $region23: #{tpu_custom_call.1} parent=15 // pred_region
          %s261 = sand.u32 %s24, 1
          %s262 = scalar_lea.sflag [#allocation6], %s261
          %s263 = sand.u32 %s85, 1
          %s264 = smul.addr %s263, 16
          %s265 = scalar_lea.vmem [#allocation5], %s264
          %s266 = smul.u32 2, %s32
          %s268 = ssub.s32 256, 256
          %269 = vsyncadd %s262, %s268
          %s270 = smul.addr %s31, 2
          %s271 = sadd.s32 %s266, %s270
          %s272 = smul.addr %s271, 128
          %s273 = scalar_lea.hbm %s1, %s272
          %s274 = sshll.u32 %s265, 4
          %s275 = int_to_ptr.vmem [resolvable:$true] %s274
          %280 = dma.hbm_to_vmem [thread:$0]  %s273, 256, %s275, %s262, 128, 128, 8
        $region24: #{tpu_custom_call.1} parent=15 // pred_fallthru
          _
        // Predicated region
        $region25: #{tpu_custom_call.1} parent=15 // pred_check
          %p281 = pneg %p123
        $region26: #{tpu_custom_call.1} parent=15 // pred_check_branch
          %283 = sbr.rel (%p281) target = $region28
        $region27: #{tpu_custom_call.1} parent=15 // pred_region
          %s284 = sand.u32 %s24, 1
          %s285 = scalar_lea.sflag [#allocation6], %s284
          %s286 = sand.u32 %s113, 1
          %s287 = smul.addr %s286, 16
          %s288 = scalar_lea.vmem [#allocation7], %s287
          %s289 = smul.u32 2, %s32
          %s291 = ssub.s32 256, 256
          %292 = vsyncadd %s285, %s291
          %s293 = smul.addr %s31, 2
          %s294 = sadd.s32 %s289, %s293
          %s295 = smul.addr %s294, 128
          %s296 = scalar_lea.hbm %s2, %s295
          %s297 = sshll.u32 %s288, 4
          %s298 = int_to_ptr.vmem [resolvable:$true] %s297
          %303 = dma.hbm_to_vmem [thread:$0]  %s296, 256, %s298, %s285, 128, 128, 8
        $region28: #{tpu_custom_call.1} parent=15 // pred_fallthru
          _
        // Predicated region
        $region29: #{tpu_custom_call.1} parent=15 // pred_check
          %p304 = pneg %p149
        $region30: #{tpu_custom_call.1} parent=15 // pred_check_branch
          %306 = sbr.rel (%p304) target = $region32
        $region31: #{tpu_custom_call.1} parent=15 // pred_region
          %p307 = scmp.lt.s32.totalorder %s31, 1
          %s308 = scalar_select %p307, %s31, 1
          %s309 = scalar_lea.vmem %s3, %s308
        $region32: #{tpu_custom_call.1} parent=15 // pred_fallthru
          _
      $region16: #{tpu_custom_call.1} parent=5 // pred_fallthru
        _
      %p310 = scmp.le.s32.totalorder 1, %s24
      %p311 = scmp.lt.s32.totalorder %s24, 3
      %p312 = pnand %p310, %p311
      %p313 = pneg %p312
      // Predicated region
      $region33: #{tpu_custom_call.1} parent=5 // pred_check
        _
      $region34: #{tpu_custom_call.1} parent=5 // pred_check_branch
        %315 = sbr.rel (%p312) target = $region36
      $region35: #{tpu_custom_call.1} parent=5 // pred_region
        %s316 = ssub.s32 %s24, 1
        %s317 = sand.u32 %s60, 1
        %s318 = scalar_lea.sflag [#allocation3], %s317
        %s319 = sand.u32 %s60, 1
        %s320 = smul.addr %s319, 16
        %s321 = scalar_lea.vmem [#allocation2], %s320
        // Predicated region
        $region37: #{tpu_custom_call.1} parent=35 // pred_check
          %p322 = pneg %p73
        $region38: #{tpu_custom_call.1} parent=35 // pred_check_branch
          %324 = sbr.rel (%p322) target = $region40
        $region39: #{tpu_custom_call.1} parent=35 // pred_region
          %325 = dma.done %s318, 256
        $region40: #{tpu_custom_call.1} parent=35 // pred_fallthru
          _
        %s326 = sand.u32 %s29, 1
        %s327 = scalar_lea.sflag [#allocation6], %s326
        %s328 = sand.u32 %s88, 1
        %s329 = smul.addr %s328, 16
        %s330 = scalar_lea.vmem [#allocation5], %s329
        // Predicated region
        $region41: #{tpu_custom_call.1} parent=35 // pred_check
          %p331 = pneg %p101
        $region42: #{tpu_custom_call.1} parent=35 // pred_check_branch
          %333 = sbr.rel (%p331) target = $region44
        $region43: #{tpu_custom_call.1} parent=35 // pred_region
          %334 = dma.done %s327, 256
        $region44: #{tpu_custom_call.1} parent=35 // pred_fallthru
          _
        %s335 = sand.u32 %s29, 1
        %s336 = scalar_lea.sflag [#allocation6], %s335
        %s337 = sand.u32 %s116, 1
        %s338 = smul.addr %s337, 16
        %s339 = scalar_lea.vmem [#allocation7], %s338
        // Predicated region
        $region45: #{tpu_custom_call.1} parent=35 // pred_check
          %p340 = pneg %p129
        $region46: #{tpu_custom_call.1} parent=35 // pred_check_branch
          %342 = sbr.rel (%p340) target = $region48
        $region47: #{tpu_custom_call.1} parent=35 // pred_region
          %343 = dma.done %s336, 256
        $region48: #{tpu_custom_call.1} parent=35 // pred_fallthru
          _
        %s344 = sand.u32 %s60, 1
        %s345 = scalar_lea.sflag [#allocation3], %s344
        %s346 = sand.u32 %s60, 1
        %s347 = smul.addr %s346, 16
        %s348 = scalar_lea.vmem [#allocation2], %s347
        %p349 = pneg %p73
        %p350 = pneg %p70
        %s351 = sand.u32 %s29, 1
        %s352 = scalar_lea.sflag [#allocation6], %s351
        %s353 = sand.u32 %s88, 1
        %s354 = smul.addr %s353, 16
        %s355 = scalar_lea.vmem [#allocation5], %s354
        %p356 = pneg %p101
        %p357 = pneg %p98
        %s358 = sand.u32 %s29, 1
        %s359 = scalar_lea.sflag [#allocation6], %s358
        %s360 = sand.u32 %s116, 1
        %s361 = smul.addr %s360, 16
        %s362 = scalar_lea.vmem [#allocation7], %s361
        %p363 = pneg %p129
        %p364 = pneg %p126
        %p365 = scmp.lt.s32.totalorder %s34, 1
        %s366 = scalar_select %p365, %s34, 1
        %s367 = scalar_lea.vmem %s3, %s366
        %p368 = pneg %p155
        %p369 = pneg %p152
        %p370 = pneg %p185
        %p371 = pneg %p182
        %s372 = sand.u32 %s172, 1
        %s373 = scalar_lea.sflag [#allocation4], %s372
        %s374 = sand.u32 %s172, 1
        %s375 = smul.addr %s374, 16
        %s376 = scalar_lea.vmem [#allocation8], %s375
        %p377 = pneg %p215
        %p378 = pneg %p212
        %s379 = sand.u32 %s202, 1
        %s380 = scalar_lea.sflag [#allocation10], %s379
        %s381 = sand.u32 %s202, 1
        %s382 = smul.addr %s381, 16
        %s383 = scalar_lea.vmem [#allocation9], %s382
        %s384 = smul.u32 2, %s35
        %s385 = smul.u32 2, %s35
        %s386 = smul.u32 2, %s35
        %p387 = scmp.lt.s32.totalorder %s34, 1
        %s388 = scalar_select %p387, %s34, 1
        %s389 = scalar_lea.vmem %s3, %s388
        %s390 = smul.u32 2, %s35
        %s391 = smul.u32 2, %s35
        %v392 = vld [vmem:[%s321] sm:$0xff]
        %v393 = vld [vmem:[%s321 + $0x8] sm:$0xff]
        %v394 = vmul.f32 %v392, 0.17677669
        %v395 = vmul.f32 %v393, 0.17677669
        %v396 = vld [vmem:[%s330] sm:$0xff]
        %v397 = vld [vmem:[%s330 + $0x8] sm:$0xff]
        %v398 = vld [vmem:[%s339] sm:$0xff]
        %v399 = vld [vmem:[%s339 + $0x8] sm:$0xff]
        %v400 = vld [vmem:[%s389] sm:$0x1]
        %v402 = vlaneseq
        %v403 = vshrl.u32 %v402, 7
        %v404 = vsub.s32 0, %v403
        %v405 = vrot.slane %v400, %v404
        %vm407 = vcmask 261120
        %v409 = vsel %vm407, %v394, 0
        %v412 = vsel %vm407, %v396, 0
        %414 = vmatprep.subr.mxu0 0.0
        %415 = vmatpush1.xpose.msra.mxu0 %v412
        %416 = vmatprep.subr.mxu0 0.0
        %417 = vmatpush1.xpose.msra.mxu0 0.0
        %418 = vmatprep.subr.mxu0 0.0
        %419 = vmatpush1.xpose.msra.mxu0 0.0
        %420 = vmatprep.subr.mxu0 0.0
        %421 = vmatpush1.xpose.msra.mxu0 0.0
        %422 = vmatprep.subr.mxu0 0.0
        %423 = vmatpush1.xpose.msra.mxu0 0.0
        %424 = vmatprep.subr.mxu0 0.0
        %425 = vmatpush1.xpose.msra.mxu0 0.0
        %426 = vmatprep.subr.mxu0 0.0
        %427 = vmatpush1.xpose.msra.mxu0 0.0
        %428 = vmatprep.subr.mxu0 0.0
        %429 = vmatpush1.xpose.msra.mxu0 0.0
        %430 = vmatprep.subr.mxu0 0.0
        %431 = vmatpush1.xpose.msra.mxu0 0.0
        %432 = vmatprep.subr.mxu0 0.0
        %433 = vmatpush1.xpose.msra.mxu0 0.0
        %434 = vmatprep.subr.mxu0 0.0
        %435 = vmatpush1.xpose.msra.mxu0 0.0
        %436 = vmatprep.subr.mxu0 0.0
        %437 = vmatpush1.xpose.msra.mxu0 0.0
        %438 = vmatprep.subr.mxu0 0.0
        %439 = vmatpush1.xpose.msra.mxu0 0.0
        %440 = vmatprep.subr.mxu0 0.0
        %441 = vmatpush1.xpose.msra.mxu0 0.0
        %442 = vmatprep.subr.mxu0 0.0
        %443 = vmatpush1.xpose.msra.mxu0 0.0
        %444 = vmatprep.subr.mxu0 0.0
        %445 = vmatpush1.xpose.msra.mxu0 0.0
        %446 = vmatprep.subr.mxu0 0.0
        %447 = vmatpush1.xpose.msra.mxu0 0.0
        %448 = vmatprep.subr.mxu0 0.0
        %449 = vmatpush1.xpose.msra.mxu0 0.0
        %450 = vmatprep.subr.mxu0 0.0
        %451 = vmatpush1.xpose.msra.mxu0 0.0
        %452 = vmatprep.subr.mxu0 0.0
        %453 = vmatpush1.xpose.msra.mxu0 0.0
        %454 = vmatprep.subr.mxu0 0.0
        %455 = vmatpush1.xpose.msra.mxu0 0.0
        %456 = vmatprep.subr.mxu0 0.0
        %457 = vmatpush1.xpose.msra.mxu0 0.0
        %458 = vmatprep.subr.mxu0 0.0
        %459 = vmatpush1.xpose.msra.mxu0 0.0
        %460 = vmatprep.subr.mxu0 0.0
        %461 = vmatpush1.xpose.msra.mxu0 0.0
        %462 = vmatprep.subr.mxu0 0.0
        %463 = vmatpush1.xpose.msra.mxu0 0.0
        %464 = vmatprep.subr.mxu0 0.0
        %465 = vmatpush1.xpose.msra.mxu0 0.0
        %466 = vmatprep.subr.mxu0 0.0
        %467 = vmatpush1.xpose.msra.mxu0 0.0
        %468 = vmatprep.subr.mxu0 0.0
        %469 = vmatpush1.xpose.msra.mxu0 0.0
        %470 = vmatprep.subr.mxu0 0.0
        %471 = vmatpush1.xpose.msra.mxu0 0.0
        %472 = vmatprep.subr.mxu0 0.0
        %473 = vmatpush1.xpose.msra.mxu0 0.0
        %474 = vmatprep.subr.mxu0 0.0
        %475 = vmatpush1.xpose.msra.mxu0 0.0
        %476 = vmatprep.subr.mxu0 0.0
        %477 = vmatpush1.xpose.msra.mxu0 0.0
        %478 = vmatprep.mubr.f32.mxu0 0.0
        %479 = vmatmul.mubr.f32.gmra.mrb[0].mxu0 %v409
        %v480 = vpop.f32.mrb[0].mxu0
        %v481 = vadd.f32 %v405, %v480
        %v482 = vpop.f32.mrb[0].mxu0
        %483 = vdwg.mxu0
        %v485 = vsel %vm407, %v395, 0
        %v488 = vsel %vm407, %v397, 0
        %490 = vmatprep.subr.mxu0 0.0
        %491 = vmatpush1.xpose.msra.mxu0 %v488
        %492 = vmatprep.subr.mxu0 0.0
        %493 = vmatpush1.xpose.msra.mxu0 0.0
        %494 = vmatprep.subr.mxu0 0.0
        %495 = vmatpush1.xpose.msra.mxu0 0.0
        %496 = vmatprep.subr.mxu0 0.0
        %497 = vmatpush1.xpose.msra.mxu0 0.0
        %498 = vmatprep.subr.mxu0 0.0
        %499 = vmatpush1.xpose.msra.mxu0 0.0
        %500 = vmatprep.subr.mxu0 0.0
        %501 = vmatpush1.xpose.msra.mxu0 0.0
        %502 = vmatprep.subr.mxu0 0.0
        %503 = vmatpush1.xpose.msra.mxu0 0.0
        %504 = vmatprep.subr.mxu0 0.0
        %505 = vmatpush1.xpose.msra.mxu0 0.0
        %506 = vmatprep.subr.mxu0 0.0
        %507 = vmatpush1.xpose.msra.mxu0 0.0
        %508 = vmatprep.subr.mxu0 0.0
        %509 = vmatpush1.xpose.msra.mxu0 0.0
        %510 = vmatprep.subr.mxu0 0.0
        %511 = vmatpush1.xpose.msra.mxu0 0.0
        %512 = vmatprep.subr.mxu0 0.0
        %513 = vmatpush1.xpose.msra.mxu0 0.0
        %514 = vmatprep.subr.mxu0 0.0
        %515 = vmatpush1.xpose.msra.mxu0 0.0
        %516 = vmatprep.subr.mxu0 0.0
        %517 = vmatpush1.xpose.msra.mxu0 0.0
        %518 = vmatprep.subr.mxu0 0.0
        %519 = vmatpush1.xpose.msra.mxu0 0.0
        %520 = vmatprep.subr.mxu0 0.0
        %521 = vmatpush1.xpose.msra.mxu0 0.0
        %522 = vmatprep.subr.mxu0 0.0
        %523 = vmatpush1.xpose.msra.mxu0 0.0
        %524 = vmatprep.subr.mxu0 0.0
        %525 = vmatpush1.xpose.msra.mxu0 0.0
        %526 = vmatprep.subr.mxu0 0.0
        %527 = vmatpush1.xpose.msra.mxu0 0.0
        %528 = vmatprep.subr.mxu0 0.0
        %529 = vmatpush1.xpose.msra.mxu0 0.0
        %530 = vmatprep.subr.mxu0 0.0
        %531 = vmatpush1.xpose.msra.mxu0 0.0
        %532 = vmatprep.subr.mxu0 0.0
        %533 = vmatpush1.xpose.msra.mxu0 0.0
        %534 = vmatprep.subr.mxu0 0.0
        %535 = vmatpush1.xpose.msra.mxu0 0.0
        %536 = vmatprep.subr.mxu0 0.0
        %537 = vmatpush1.xpose.msra.mxu0 0.0
        %538 = vmatprep.subr.mxu0 0.0
        %539 = vmatpush1.xpose.msra.mxu0 0.0
        %540 = vmatprep.subr.mxu0 0.0
        %541 = vmatpush1.xpose.msra.mxu0 0.0
        %542 = vmatprep.subr.mxu0 0.0
        %543 = vmatpush1.xpose.msra.mxu0 0.0
        %544 = vmatprep.subr.mxu0 0.0
        %545 = vmatpush1.xpose.msra.mxu0 0.0
        %546 = vmatprep.subr.mxu0 0.0
        %547 = vmatpush1.xpose.msra.mxu0 0.0
        %548 = vmatprep.subr.mxu0 0.0
        %549 = vmatpush1.xpose.msra.mxu0 0.0
        %550 = vmatprep.subr.mxu0 0.0
        %551 = vmatpush1.xpose.msra.mxu0 0.0
        %552 = vmatprep.subr.mxu0 0.0
        %553 = vmatpush1.xpose.msra.mxu0 0.0
        %554 = vmatprep.mubr.f32.mxu0 0.0
        %555 = vmatmul.mubr.f32.gmra.mrb[0].mxu0 %v485
        %v556 = vpop.f32.mrb[0].mxu0
        %v557 = vadd.f32 %v405, %v556
        %v558 = vpop.f32.mrb[0].mxu0
        %559 = vdwg.mxu0
        %vm560 = vcmask 64512
        %v561 = vsel %vm560, %v481, -inf
        %562 = vmax.xlane.f32.xlu0 %v561
        %v563 = vpop.xlane.xlu0 %562
        %v564 = vsel %vm560, %v557, -inf
        %565 = vmax.xlane.f32.xlu0 %v564
        %v566 = vpop.xlane.xlu0 %565
        %v567 = vsub.f32 %v481, %v563
        %v568 = vsub.f32 %v557, %v566
        %v569 = vmul.f32 %v567, 1.442695
        %v570 = vpow.pop %v569
        %v571 = vmul.f32 %v568, 1.442695
        %v572 = vpow.pop %v571
        %v573 = vsel %vm560, %v570, 0.0
        %574 = vadd.xlane.f32.xlu0 %v573
        %v575 = vpop.xlane.xlu0 %574
        %v576 = vsel %vm560, %v572, 0.0
        %577 = vadd.xlane.f32.xlu0 %v576
        %v578 = vpop.xlane.xlu0 %577
        %v579 = vrcp.pop %v575
        %v580 = vmul.f32 %v570, %v579
        %v581 = vrcp.pop %v578
        %v582 = vmul.f32 %v572, %v581
        %v584 = vsel %vm560, %v580, 0
        %586 = vmatprep.subr.mxu0 0.0
        %587 = vmatpush1.msra.mxu0 %v398
        %588 = vmatprep.subr.mxu0 0.0
        %589 = vmatpush1.msra.mxu0 0.0
        %590 = vmatprep.subr.mxu0 0.0
        %591 = vmatpush1.msra.mxu0 0.0
        %592 = vmatprep.subr.mxu0 0.0
        %593 = vmatpush1.msra.mxu0 0.0
        %594 = vmatprep.subr.mxu0 0.0
        %595 = vmatpush1.msra.mxu0 0.0
        %596 = vmatprep.subr.mxu0 0.0
        %597 = vmatpush1.msra.mxu0 0.0
        %598 = vmatprep.subr.mxu0 0.0
        %599 = vmatpush1.msra.mxu0 0.0
        %600 = vmatprep.subr.mxu0 0.0
        %601 = vmatpush1.msra.mxu0 0.0
        %602 = vmatprep.subr.mxu0 0.0
        %603 = vmatpush1.msra.mxu0 0.0
        %604 = vmatprep.subr.mxu0 0.0
        %605 = vmatpush1.msra.mxu0 0.0
        %606 = vmatprep.subr.mxu0 0.0
        %607 = vmatpush1.msra.mxu0 0.0
        %608 = vmatprep.subr.mxu0 0.0
        %609 = vmatpush1.msra.mxu0 0.0
        %610 = vmatprep.subr.mxu0 0.0
        %611 = vmatpush1.msra.mxu0 0.0
        %612 = vmatprep.subr.mxu0 0.0
        %613 = vmatpush1.msra.mxu0 0.0
        %614 = vmatprep.subr.mxu0 0.0
        %615 = vmatpush1.msra.mxu0 0.0
        %616 = vmatprep.subr.mxu0 0.0
        %617 = vmatpush1.msra.mxu0 0.0
        %618 = vmatprep.subr.mxu0 0.0
        %619 = vmatpush1.msra.mxu0 0.0
        %620 = vmatprep.subr.mxu0 0.0
        %621 = vmatpush1.msra.mxu0 0.0
        %622 = vmatprep.subr.mxu0 0.0
        %623 = vmatpush1.msra.mxu0 0.0
        %624 = vmatprep.subr.mxu0 0.0
        %625 = vmatpush1.msra.mxu0 0.0
        %626 = vmatprep.subr.mxu0 0.0
        %627 = vmatpush1.msra.mxu0 0.0
        %628 = vmatprep.subr.mxu0 0.0
        %629 = vmatpush1.msra.mxu0 0.0
        %630 = vmatprep.subr.mxu0 0.0
        %631 = vmatpush1.msra.mxu0 0.0
        %632 = vmatprep.subr.mxu0 0.0
        %633 = vmatpush1.msra.mxu0 0.0
        %634 = vmatprep.subr.mxu0 0.0
        %635 = vmatpush1.msra.mxu0 0.0
        %636 = vmatprep.subr.mxu0 0.0
        %637 = vmatpush1.msra.mxu0 0.0
        %638 = vmatprep.subr.mxu0 0.0
        %639 = vmatpush1.msra.mxu0 0.0
        %640 = vmatprep.subr.mxu0 0.0
        %641 = vmatpush1.msra.mxu0 0.0
        %642 = vmatprep.subr.mxu0 0.0
        %643 = vmatpush1.msra.mxu0 0.0
        %644 = vmatprep.subr.mxu0 0.0
        %645 = vmatpush1.msra.mxu0 0.0
        %646 = vmatprep.subr.mxu0 0.0
        %647 = vmatpush1.msra.mxu0 0.0
        %648 = vmatprep.subr.mxu0 0.0
        %649 = vmatpush1.msra.mxu0 0.0
        %650 = vmatprep.mubr.f32.mxu0 0.0
        %651 = vmatmul.mubr.f32.gmra.mrb[0].mxu0 %v584
        %v652 = vpop.f32.mrb[0].mxu0
        %v653 = vadd.f32 0.0, %v652
        %v654 = vpop.f32.mrb[0].mxu0
        %655 = vdwg.mxu0
        %v657 = vsel %vm560, %v582, 0
        %659 = vmatprep.subr.mxu0 0.0
        %660 = vmatpush1.msra.mxu0 %v399
        %661 = vmatprep.subr.mxu0 0.0
        %662 = vmatpush1.msra.mxu0 0.0
        %663 = vmatprep.subr.mxu0 0.0
        %664 = vmatpush1.msra.mxu0 0.0
        %665 = vmatprep.subr.mxu0 0.0
        %666 = vmatpush1.msra.mxu0 0.0
        %667 = vmatprep.subr.mxu0 0.0
        %668 = vmatpush1.msra.mxu0 0.0
        %669 = vmatprep.subr.mxu0 0.0
        %670 = vmatpush1.msra.mxu0 0.0
        %671 = vmatprep.subr.mxu0 0.0
        %672 = vmatpush1.msra.mxu0 0.0
        %673 = vmatprep.subr.mxu0 0.0
        %674 = vmatpush1.msra.mxu0 0.0
        %675 = vmatprep.subr.mxu0 0.0
        %676 = vmatpush1.msra.mxu0 0.0
        %677 = vmatprep.subr.mxu0 0.0
        %678 = vmatpush1.msra.mxu0 0.0
        %679 = vmatprep.subr.mxu0 0.0
        %680 = vmatpush1.msra.mxu0 0.0
        %681 = vmatprep.subr.mxu0 0.0
        %682 = vmatpush1.msra.mxu0 0.0
        %683 = vmatprep.subr.mxu0 0.0
        %684 = vmatpush1.msra.mxu0 0.0
        %685 = vmatprep.subr.mxu0 0.0
        %686 = vmatpush1.msra.mxu0 0.0
        %687 = vmatprep.subr.mxu0 0.0
        %688 = vmatpush1.msra.mxu0 0.0
        %689 = vmatprep.subr.mxu0 0.0
        %690 = vmatpush1.msra.mxu0 0.0
        %691 = vmatprep.subr.mxu0 0.0
        %692 = vmatpush1.msra.mxu0 0.0
        %693 = vmatprep.subr.mxu0 0.0
        %694 = vmatpush1.msra.mxu0 0.0
        %695 = vmatprep.subr.mxu0 0.0
        %696 = vmatpush1.msra.mxu0 0.0
        %697 = vmatprep.subr.mxu0 0.0
        %698 = vmatpush1.msra.mxu0 0.0
        %699 = vmatprep.subr.mxu0 0.0
        %700 = vmatpush1.msra.mxu0 0.0
        %701 = vmatprep.subr.mxu0 0.0
        %702 = vmatpush1.msra.mxu0 0.0
        %703 = vmatprep.subr.mxu0 0.0
        %704 = vmatpush1.msra.mxu0 0.0
        %705 = vmatprep.subr.mxu0 0.0
        %706 = vmatpush1.msra.mxu0 0.0
        %707 = vmatprep.subr.mxu0 0.0
        %708 = vmatpush1.msra.mxu0 0.0
        %709 = vmatprep.subr.mxu0 0.0
        %710 = vmatpush1.msra.mxu0 0.0
        %711 = vmatprep.subr.mxu0 0.0
        %712 = vmatpush1.msra.mxu0 0.0
        %713 = vmatprep.subr.mxu0 0.0
        %714 = vmatpush1.msra.mxu0 0.0
        %715 = vmatprep.subr.mxu0 0.0
        %716 = vmatpush1.msra.mxu0 0.0
        %717 = vmatprep.subr.mxu0 0.0
        %718 = vmatpush1.msra.mxu0 0.0
        %719 = vmatprep.subr.mxu0 0.0
        %720 = vmatpush1.msra.mxu0 0.0
        %721 = vmatprep.subr.mxu0 0.0
        %722 = vmatpush1.msra.mxu0 0.0
        %723 = vmatprep.mubr.f32.mxu0 0.0
        %724 = vmatmul.mubr.f32.gmra.mrb[0].mxu0 %v657
        %v725 = vpop.f32.mrb[0].mxu0
        %v726 = vadd.f32 0.0, %v725
        %v727 = vpop.f32.mrb[0].mxu0
        %728 = vdwg.mxu0
        %729 = vst.msk [vmem:[%s376] sm:$0xff] %vm407, %v653
        %730 = vst.msk [vmem:[%s376 + $0x8] sm:$0xff] %vm407, %v726
        %731 = vst.msk [vmem:[%s383] sm:$0xff] %vm560, %v580
        %732 = vst.msk [vmem:[%s383 + $0x8] sm:$0xff] %vm560, %v582
        %s733 = sand.u32 %s172, 1
        %s734 = scalar_lea.sflag [#allocation4], %s733
        %s735 = sand.u32 %s172, 1
        %s736 = smul.addr %s735, 16
        %s737 = scalar_lea.vmem [#allocation8], %s736
        %s738 = sand.u32 %s202, 1
        %s739 = scalar_lea.sflag [#allocation10], %s738
        %s740 = sand.u32 %s202, 1
        %s741 = smul.addr %s740, 16
        %s742 = scalar_lea.vmem [#allocation9], %s741
        // Predicated region
        $region49: #{tpu_custom_call.1} parent=35 // pred_check
          %p743 = pneg %p182
        $region50: #{tpu_custom_call.1} parent=35 // pred_check_branch
          %745 = sbr.rel (%p743) target = $region52
        $region51: #{tpu_custom_call.1} parent=35 // pred_region
          %s746 = smul.u32 2, %s35
          %s748 = ssub.s32 256, 256
          %749 = vsyncadd %s734, %s748
          %s750 = sadd.s32 %s36, %s746
          %s751 = smul.addr %s34, 2
          %s752 = sadd.s32 %s750, %s751
          %s753 = smul.addr %s752, 128
          %s754 = scalar_lea.hbm %s4, %s753
          %s755 = sshll.u32 %s737, 4
          %s756 = int_to_ptr.vmem [resolvable:$true] %s755
          %761 = dma.vmem_to_hbm [thread:$0]  %s756, 256, %s754, %s734, 128, 128, 8
        $region52: #{tpu_custom_call.1} parent=35 // pred_fallthru
          _
        // Predicated region
        $region53: #{tpu_custom_call.1} parent=35 // pred_check
          %p762 = pneg %p212
        $region54: #{tpu_custom_call.1} parent=35 // pred_check_branch
          %764 = sbr.rel (%p762) target = $region56
        $region55: #{tpu_custom_call.1} parent=35 // pred_region
          %s765 = smul.u32 2, %s35
          %s767 = ssub.s32 256, 256
          %768 = vsyncadd %s739, %s767
          %s769 = sadd.s32 %s36, %s765
          %s770 = smul.addr %s34, 2
          %s771 = sadd.s32 %s769, %s770
          %s772 = smul.addr %s771, 128
          %s773 = scalar_lea.hbm %s5, %s772
          %s774 = sshll.u32 %s742, 4
          %s775 = int_to_ptr.vmem [resolvable:$true] %s774
          %780 = dma.vmem_to_hbm [thread:$0]  %s775, 256, %s773, %s739, 128, 128, 8
        $region56: #{tpu_custom_call.1} parent=35 // pred_fallthru
          _
      $region36: #{tpu_custom_call.1} parent=5 // pred_fallthru
        _
      %p781 = scmp.le.s32.totalorder 2, %s24
      // Predicated region
      $region57: #{tpu_custom_call.1} parent=5 // pred_check
        %p782 = pneg %p781
      $region58: #{tpu_custom_call.1} parent=5 // pred_check_branch
        %784 = sbr.rel (%p782) target = $region60
      $region59: #{tpu_custom_call.1} parent=5 // pred_region
        %s785 = ssub.s32 %s24, 2
        // Predicated region
        $region61: #{tpu_custom_call.1} parent=59 // pred_check
          %p786 = pneg %p188
        $region62: #{tpu_custom_call.1} parent=59 // pred_check_branch
          %788 = sbr.rel (%p786) target = $region64
        $region63: #{tpu_custom_call.1} parent=59 // pred_region
          %s789 = sand.u32 %s173, 1
          %s790 = scalar_lea.sflag [#allocation4], %s789
          %s791 = sand.u32 %s173, 1
          %s792 = smul.addr %s791, 16
          %s793 = scalar_lea.vmem [#allocation8], %s792
          %794 = dma.done %s790, 256
        $region64: #{tpu_custom_call.1} parent=59 // pred_fallthru
          _
        // Predicated region
        $region65: #{tpu_custom_call.1} parent=59 // pred_check
          %p795 = pneg %p218
        $region66: #{tpu_custom_call.1} parent=59 // pred_check_branch
          %797 = sbr.rel (%p795) target = $region68
        $region67: #{tpu_custom_call.1} parent=59 // pred_region
          %s798 = sand.u32 %s203, 1
          %s799 = scalar_lea.sflag [#allocation10], %s798
          %s800 = sand.u32 %s203, 1
          %s801 = smul.addr %s800, 16
          %s802 = scalar_lea.vmem [#allocation9], %s801
          %803 = dma.done %s799, 256
        $region68: #{tpu_custom_call.1} parent=59 // pred_fallthru
          _
      $region60: #{tpu_custom_call.1} parent=5 // pred_fallthru
        _
    $region6: #{tpu_custom_call.1} parent=1 // loop_footer
      %s28 = sadd.s32 1, %s24
    $region7: #{tpu_custom_call.1} parent=1 // loop_footer_branch
      %23 = sbr.rel target = $region3
    $region8: #{tpu_custom_call.1} parent=1 // loop_exit
      _
    %804 = vsyncpa [#allocation3], 1
    %s805 = scalar_lea.sflag [#allocation3], 1
    %806 = vsyncpa %s805, 1
    %807 = vsyncpa [#allocation6], 1
    %s808 = scalar_lea.sflag [#allocation6], 1
    %809 = vsyncpa %s808, 1
    %810 = vsyncpa [#allocation4], 1
    %s811 = scalar_lea.sflag [#allocation4], 1
    %812 = vsyncpa %s811, 1
    %813 = vsyncpa [#allocation10], 1
    %s814 = scalar_lea.sflag [#allocation10], 1
    %815 = vsyncpa %s814, 1

</llo_original>
